<compile_context>
chip_gen: v6e
topology: v6e:2x2x1
jax: 0.10.0
libtpu: 0.0.40
codegen_flags: <defaults>
</compile_context>

<pallas_src>
import functools
import math

import jax
import jax.numpy as jnp
from jax.experimental import pallas as pl
from jax.experimental.pallas import tpu as pltpu


def best_group_divisor(c, gmax=8):
    for g in range(min(gmax, c), 0, -1):
        if c % g == 0:
            return g
    return 1


# ---------------------------------------------------------------------------
# Kernel 1: tiny scalar chain, one invocation.
#   o[b, :] = (LayerNorm(act[b]) @ Wv + bv) @ Wout + bout
# ---------------------------------------------------------------------------
def _residual_column_kernel(act_ref, lnp_ref, wv_ref, bv_ref, wout_ref, bout_ref,
                            o_ref, *, eps_ln=1e-5):
    a = act_ref[...]                                   # (B, A) f32
    lnp = lnp_ref[...]                                 # (2, A): rows = [gamma, beta]
    mu = jnp.mean(a, axis=-1, keepdims=True)
    var = jnp.mean((a - mu) ** 2, axis=-1, keepdims=True)
    an = (a - mu) * jax.lax.rsqrt(var + eps_ln)
    an = an * lnp[0:1, :] + lnp[1:2, :]                # (B, A)
    v = jnp.dot(an, wv_ref[...], preferred_element_type=jnp.float32) + bv_ref[...]     # (B, C)
    o = jnp.dot(v, wout_ref[...], preferred_element_type=jnp.float32) + bout_ref[...]  # (B, C)
    o_ref[...] = o


# ---------------------------------------------------------------------------
# Kernel 2: HBM-bound streaming residual add over (B*C, HW) rows.
# ---------------------------------------------------------------------------
def _residual_add_kernel(img_ref, col_ref, out_ref):
    x = img_ref[...].astype(jnp.float32)               # (TR, HW), per-tile upcast
    out_ref[...] = (x + col_ref[...]).astype(out_ref.dtype)   # (TR,1) lane-broadcast


def _pick_row_block(total_rows, row_bytes, max_block_bytes=4 << 20, min_steps=2):
    """Largest row block that (a) is a multiple of 8 (or the full extent), (b) divides
    total_rows, (c) stays under a ~4 MiB per-block budget (safe for v7x's smaller VMEM
    with double-buffered input+output), and (d) leaves >= min_steps grid steps when
    possible so both TensorCores on v7x get work (negligible cost on 1-TC v5e/v6e)."""
    divisors = [d for d in range(8, total_rows + 1, 8) if total_rows % d == 0]
    if not divisors:
        return total_rows                              # full extent is always legal
    fits = [d for d in divisors if d * row_bytes <= max_block_bytes] or [min(divisors)]
    multi = [d for d in fits if total_rows // d >= min_steps]
    return max(multi) if multi else max(fits)


@functools.partial(jax.jit, static_argnames=("heads", "in_place"))
def cross_attention_block(img, act, params, heads=4, in_place=False):
    """img: (B, C, H, W) NCHW (any float dtype); act: (B, act_c). Returns (B, C, H, W)."""
    del heads  # length-1 key/value: the forward result is independent of the head split
    B, C, H, W = img.shape
    # The exact length-1-key simplification requires a single action token per batch.
    assert act.ndim == 2 and act.shape[0] == B, "expected act of shape (B, act_c)"
    A = act.shape[1]
    HW = H * W
    f32 = jnp.float32

    full = lambda shape: pl.BlockSpec(shape, lambda i: (0,) * len(shape))

    # ---- tiny per-batch residual column, computed ONCE (Pallas kernel 1) ----
    lnp = jnp.stack([params["ln_gamma"], params["ln_beta"]], axis=0).astype(f32)  # (2, A)
    ocol = pl.pallas_call(
        _residual_column_kernel,
        out_shape=jax.ShapeDtypeStruct((B, C), f32),
        grid=(1,),
        in_specs=[full((B, A)), full((2, A)), full((A, C)), full((1, C)),
                  full((C, C)), full((1, C))],
        out_specs=full((B, C)),
    )(act.astype(f32), lnp,
      params["wv"].astype(f32), params["bv"].reshape(1, C).astype(f32),
      params["wout"].astype(f32), params["bout"].reshape(1, C).astype(f32))

    # ---- streaming residual add (Pallas kernel 2) ----
    img2 = img.reshape(B * C, HW)          # native dtype, pure reshape (no cast pass)
    col2 = ocol.reshape(B * C, 1)
    rows = B * C
    row_block = _pick_row_block(rows, HW * img.dtype.itemsize)
    # TODO(synk): if HW is not a multiple of 128 (e.g. 14x14 spatial), pad the lane dim
    # in the wrapper to keep dense unmasked stores; correctness is unaffected either way.
    out2 = pl.pallas_call(
        _residual_add_kernel,
        out_shape=jax.ShapeDtypeStruct((rows, HW), img.dtype),
        grid=(rows // row_block,),
        in_specs=[pl.BlockSpec((row_block, HW), lambda r: (r, 0)),
                  pl.BlockSpec((row_block, 1), lambda r: (r, 0))],
        out_specs=pl.BlockSpec((row_block, HW), lambda r: (r, 0)),
        compiler_params=pltpu.CompilerParams(
            dimension_semantics=("parallel",),
            vmem_limit_bytes=32 << 20),
        # Optional in-place residual add (only if the caller does not reuse img).
        input_output_aliases=({0: 0} if in_place else {}),
    )(img2, col2)

    return out2.reshape(B, C, H, W)


def reference(img, act, p, heads):
    """Pure-JAX mirror of the full PyTorch forward (incl. GroupNorm / q / k / softmax)."""
    B, C, H, W = img.shape
    G = best_group_divisor(C)
    cs = C // G
    xr = img.reshape(B, G, cs, H, W)
    mu = xr.mean(axis=(2, 3, 4), keepdims=True)
    var = ((xr - mu) ** 2).mean(axis=(2, 3, 4), keepdims=True)
    xn = ((xr - mu) / jnp.sqrt(var + 1e-5)).reshape(B, C, H, W)
    xn = xn * p["gn_gamma"][None, :, None, None] + p["gn_beta"][None, :, None, None]

    amu = act.mean(-1, keepdims=True)
    avar = ((act - amu) ** 2).mean(-1, keepdims=True)
    an = (act - amu) / jnp.sqrt(avar + 1e-5) * p["ln_gamma"] + p["ln_beta"]

    xf = xn.reshape(B, C, H * W).transpose(0, 2, 1)
    q = xf @ p["wq"] + p["bq"]
    k = an @ p["wk"] + p["bk"]
    v = an @ p["wv"] + p["bv"]
    d = C // heads
    qh = q.reshape(B, H * W, heads, d).transpose(0, 2, 1, 3)
    kh = k.reshape(B, 1, heads, d).transpose(0, 2, 1, 3)
    vh = v.reshape(B, 1, heads, d).transpose(0, 2, 1, 3)
    attn = jax.nn.softmax(jnp.einsum("bhqd,bhkd->bhqk", qh, kh) / math.sqrt(d), axis=-1)
    out = jnp.einsum("bhqk,bhkd->bhqd", attn, vh).transpose(0, 2, 1, 3).reshape(B, H * W, C)
    out = out @ p["wout"] + p["bout"]
    out = out.transpose(0, 2, 1).reshape(B, C, H, W)
    return img + out


if __name__ == "__main__":
    B, C, H, W = 2, 32, 16, 16   # img_c = 32
    A = 8                        # act_c = 8
    heads = 4

    key = jax.random.PRNGKey(0)
    ks = jax.random.split(key, 16)
    f32 = jnp.float32

    img = jax.random.normal(ks[0], (B, C, H, W), f32)
    act = jax.random.normal(ks[1], (B, A), f32)

    # Deterministic synthetic parameters (weights stored as (in, out), like x @ W).
    params = {
        "gn_gamma": 1.0 + 0.1 * jax.random.normal(ks[2], (C,), f32),
        "gn_beta": 0.1 * jax.random.normal(ks[3], (C,), f32),
        "ln_gamma": 1.0 + 0.1 * jax.random.normal(ks[4], (A,), f32),
        "ln_beta": 0.1 * jax.random.normal(ks[5], (A,), f32),
        "wq": 0.1 * jax.random.normal(ks[6], (C, C), f32),
        "bq": 0.1 * jax.random.normal(ks[7], (C,), f32),
        "wk": 0.1 * jax.random.normal(ks[8], (A, C), f32),
        "bk": 0.1 * jax.random.normal(ks[9], (C,), f32),
        "wv": 0.1 * jax.random.normal(ks[10], (A, C), f32),
        "bv": 0.1 * jax.random.normal(ks[11], (C,), f32),
        "wout": 0.1 * jax.random.normal(ks[12], (C, C), f32),
        "bout": 0.1 * jax.random.normal(ks[13], (C,), f32),
    }

    out = cross_attention_block(img, act, params, heads=heads)
    out = jax.block_until_ready(out)

    ref = jax.block_until_ready(reference(img, act, params, heads))
    assert out.shape == (B, C, H, W)
    err = float(jnp.max(jnp.abs(out - ref)))
    assert jnp.allclose(out, ref, atol=1e-3, rtol=1e-3), err

    print("KERNEL_OK")
</pallas_src>

<mosaic_0001>
module attributes {stable_mosaic.version = 11 : i64} {
  func.func @_residual_column_kernel(%arg0: i32, %arg1: memref<2x8xf32, #tpu.memory_space<vmem>>, %arg2: memref<2x8xf32, #tpu.memory_space<vmem>>, %arg3: memref<8x32xf32, #tpu.memory_space<vmem>>, %arg4: memref<1x32xf32, #tpu.memory_space<vmem>>, %arg5: memref<32x32xf32, #tpu.memory_space<vmem>>, %arg6: memref<1x32xf32, #tpu.memory_space<vmem>>, %arg7: memref<2x32xf32, #tpu.memory_space<vmem>>) attributes {dimension_semantics = [#tpu.dimension_semantics<arbitrary>], iteration_bounds = array<i64: 1>, scalar_prefetch = 0 : i64, scratch_operands = 0 : i64, tpu.core_type = #tpu.core_type<tc>, window_params = [{pipeline_mode = #tpu.pipeline_mode<synchronous>, transform_indices = @transform_0, window_bounds = array<i64: 2, 8>}, {pipeline_mode = #tpu.pipeline_mode<synchronous>, transform_indices = @transform_1, window_bounds = array<i64: 2, 8>}, {pipeline_mode = #tpu.pipeline_mode<synchronous>, transform_indices = @transform_2, window_bounds = array<i64: 8, 32>}, {pipeline_mode = #tpu.pipeline_mode<synchronous>, transform_indices = @transform_3, window_bounds = array<i64: 1, 32>}, {pipeline_mode = #tpu.pipeline_mode<synchronous>, transform_indices = @transform_4, window_bounds = array<i64: 32, 32>}, {pipeline_mode = #tpu.pipeline_mode<synchronous>, transform_indices = @transform_5, window_bounds = array<i64: 1, 32>}, {pipeline_mode = #tpu.pipeline_mode<synchronous>, transform_indices = @transform_6, window_bounds = array<i64: 2, 32>}]} {
    %c0 = arith.constant 0 : index
    %c0_0 = arith.constant 0 : index
    %0 = vector.load %arg1[%c0, %c0_0] : memref<2x8xf32, #tpu.memory_space<vmem>>, vector<2x8xf32>
    %c0_1 = arith.constant 0 : index
    %c0_2 = arith.constant 0 : index
    %1 = vector.load %arg2[%c0_1, %c0_2] : memref<2x8xf32, #tpu.memory_space<vmem>>, vector<2x8xf32>
    %cst = arith.constant dense<0.000000e+00> : vector<2xf32>
    %2 = vector.multi_reduction <add>, %0, %cst [1] : vector<2x8xf32> to vector<2xf32>
    %3 = vector.shape_cast %2 : vector<2xf32> to vector<2x1xf32>
    %cst_3 = arith.constant 8.000000e+00 : f32
    %4 = vector.broadcast %cst_3 : f32 to vector<2x1xf32>
    %5 = arith.divf %3, %4 : vector<2x1xf32>
    %6 = vector.broadcast %5 : vector<2x1xf32> to vector<2x8xf32>
    %7 = arith.subf %0, %6 : vector<2x8xf32>
    %8 = arith.mulf %7, %7 : vector<2x8xf32>
    %cst_4 = arith.constant dense<0.000000e+00> : vector<2xf32>
    %9 = vector.multi_reduction <add>, %8, %cst_4 [1] : vector<2x8xf32> to vector<2xf32>
    %10 = vector.shape_cast %9 : vector<2xf32> to vector<2x1xf32>
    %cst_5 = arith.constant 8.000000e+00 : f32
    %11 = vector.broadcast %cst_5 : f32 to vector<2x1xf32>
    %12 = arith.divf %10, %11 : vector<2x1xf32>
    %13 = vector.broadcast %5 : vector<2x1xf32> to vector<2x8xf32>
    %14 = arith.subf %0, %13 : vector<2x8xf32>
    %cst_6 = arith.constant 9.99999974E-6 : f32
    %15 = vector.broadcast %cst_6 : f32 to vector<2x1xf32>
    %16 = arith.addf %12, %15 : vector<2x1xf32>
    %17 = math.rsqrt %16 : vector<2x1xf32>
    %18 = vector.broadcast %17 : vector<2x1xf32> to vector<2x8xf32>
    %19 = arith.mulf %14, %18 : vector<2x8xf32>
    %20 = vector.extract_strided_slice %1 {offsets = [0, 0], sizes = [1, 8], strides = [1, 1]} : vector<2x8xf32> to vector<1x8xf32>
    %21 = vector.broadcast %20 : vector<1x8xf32> to vector<2x8xf32>
    %22 = arith.mulf %19, %21 : vector<2x8xf32>
    %23 = vector.extract_strided_slice %1 {offsets = [1, 0], sizes = [1, 8], strides = [1, 1]} : vector<2x8xf32> to vector<1x8xf32>
    %24 = vector.broadcast %23 : vector<1x8xf32> to vector<2x8xf32>
    %25 = arith.addf %22, %24 : vector<2x8xf32>
    %c0_7 = arith.constant 0 : index
    %c0_8 = arith.constant 0 : index
    %26 = vector.load %arg3[%c0_7, %c0_8] : memref<8x32xf32, #tpu.memory_space<vmem>>, vector<8x32xf32>
    %cst_9 = arith.constant dense<0.000000e+00> : vector<2x32xf32>
    %27 = tpu.matmul %25, %26, %cst_9 {dimension_numbers = #tpu.dot_dimension_numbers<[1], [0], [0], [1], [0, 0, 1, 1], [], []>} : vector<2x8xf32>, vector<8x32xf32>, vector<2x32xf32> -> vector<2x32xf32>
    %c0_10 = arith.constant 0 : index
    %c0_11 = arith.constant 0 : index
    %28 = vector.load %arg4[%c0_10, %c0_11] : memref<1x32xf32, #tpu.memory_space<vmem>>, vector<1x32xf32>
    %29 = vector.broadcast %28 : vector<1x32xf32> to vector<2x32xf32>
    %30 = arith.addf %27, %29 : vector<2x32xf32>
    %c0_12 = arith.constant 0 : index
    %c0_13 = arith.constant 0 : index
    %31 = vector.load %arg5[%c0_12, %c0_13] : memref<32x32xf32, #tpu.memory_space<vmem>>, vector<32x32xf32>
    %cst_14 = arith.constant dense<0.000000e+00> : vector<2x32xf32>
    %32 = tpu.matmul %30, %31, %cst_14 {dimension_numbers = #tpu.dot_dimension_numbers<[1], [0], [0], [1], [0, 0, 1, 1], [], []>} : vector<2x32xf32>, vector<32x32xf32>, vector<2x32xf32> -> vector<2x32xf32>
    %c0_15 = arith.constant 0 : index
    %c0_16 = arith.constant 0 : index
    %33 = vector.load %arg6[%c0_15, %c0_16] : memref<1x32xf32, #tpu.memory_space<vmem>>, vector<1x32xf32>
    %34 = vector.broadcast %33 : vector<1x32xf32> to vector<2x32xf32>
    %35 = arith.addf %32, %34 : vector<2x32xf32>
    %c0_17 = arith.constant 0 : index
    %c0_18 = arith.constant 0 : index
    %36 = vector.load %arg7[%c0_17, %c0_18] : memref<2x32xf32, #tpu.memory_space<vmem>>, vector<2x32xf32>
    tpu.vector_store %arg7[%c0_17, %c0_18], %35 {strides = array<i32>} : memref<2x32xf32, #tpu.memory_space<vmem>>, vector<2x32xf32>,
    return
  }
  func.func @transform_0(%arg0: i32) -> (i32, i32) {
    %c0_i32 = arith.constant 0 : i32
    %c0_i32_0 = arith.constant 0 : i32
    %c0_i32_1 = arith.constant 0 : i32
    return %c0_i32, %c0_i32_0 : i32, i32
  }
  func.func @transform_1(%arg0: i32) -> (i32, i32) {
    %c0_i32 = arith.constant 0 : i32
    %c0_i32_0 = arith.constant 0 : i32
    %c0_i32_1 = arith.constant 0 : i32
    return %c0_i32, %c0_i32_0 : i32, i32
  }
  func.func @transform_2(%arg0: i32) -> (i32, i32) {
    %c0_i32 = arith.constant 0 : i32
    %c0_i32_0 = arith.constant 0 : i32
    %c0_i32_1 = arith.constant 0 : i32
    return %c0_i32, %c0_i32_0 : i32, i32
  }
  func.func @transform_3(%arg0: i32) -> (i32, i32) {
    %c0_i32 = arith.constant 0 : i32
    %c0_i32_0 = arith.constant 0 : i32
    %c0_i32_1 = arith.constant 0 : i32
    return %c0_i32, %c0_i32_0 : i32, i32
  }
  func.func @transform_4(%arg0: i32) -> (i32, i32) {
    %c0_i32 = arith.constant 0 : i32
    %c0_i32_0 = arith.constant 0 : i32
    %c0_i32_1 = arith.constant 0 : i32
    return %c0_i32, %c0_i32_0 : i32, i32
  }
  func.func @transform_5(%arg0: i32) -> (i32, i32) {
    %c0_i32 = arith.constant 0 : i32
    %c0_i32_0 = arith.constant 0 : i32
    %c0_i32_1 = arith.constant 0 : i32
    return %c0_i32, %c0_i32_0 : i32, i32
  }
  func.func @transform_6(%arg0: i32) -> (i32, i32) {
    %c0_i32 = arith.constant 0 : i32
    %c0_i32_0 = arith.constant 0 : i32
    %c0_i32_1 = arith.constant 0 : i32
    return %c0_i32, %c0_i32_0 : i32, i32
  }
}

module attributes {stable_mosaic.version = 11 : i64} {
  func.func @_residual_add_kernel(%arg0: i32, %arg1: memref<32x256xf32, #tpu.memory_space<vmem>>, %arg2: memref<32x1xf32, #tpu.memory_space<vmem>>, %arg3: memref<32x256xf32, #tpu.memory_space<vmem>>) attributes {dimension_semantics = [#tpu.dimension_semantics<parallel>], iteration_bounds = array<i64: 2>, scalar_prefetch = 0 : i64, scratch_operands = 0 : i64, tpu.core_type = #tpu.core_type<tc>, window_params = [{transform_indices = @transform_0, window_bounds = array<i64: 32, 256>}, {transform_indices = @transform_1, window_bounds = array<i64: 32, 1>}, {transform_indices = @transform_2, window_bounds = array<i64: 32, 256>}]} {
    %c0 = arith.constant 0 : index
    %c0_0 = arith.constant 0 : index
    %0 = vector.load %arg1[%c0, %c0_0] : memref<32x256xf32, #tpu.memory_space<vmem>>, vector<32x256xf32>
    %c0_1 = arith.constant 0 : index
    %c0_2 = arith.constant 0 : index
    %1 = vector.load %arg2[%c0_1, %c0_2] : memref<32x1xf32, #tpu.memory_space<vmem>>, vector<32x1xf32>
    %2 = vector.broadcast %1 : vector<32x1xf32> to vector<32x256xf32>
    %3 = arith.addf %0, %2 : vector<32x256xf32>
    %c0_3 = arith.constant 0 : index
    %c0_4 = arith.constant 0 : index
    %4 = vector.load %arg3[%c0_3, %c0_4] : memref<32x256xf32, #tpu.memory_space<vmem>>, vector<32x256xf32>
    tpu.vector_store %arg3[%c0_3, %c0_4], %3 {strides = array<i32>} : memref<32x256xf32, #tpu.memory_space<vmem>>, vector<32x256xf32>,
    return
  }
  func.func @transform_0(%arg0: i32) -> (i32, i32) {
    %c0_i32 = arith.constant 0 : i32
    %c0_i32_0 = arith.constant 0 : i32
    return %arg0, %c0_i32 : i32, i32
  }
  func.func @transform_1(%arg0: i32) -> (i32, i32) {
    %c0_i32 = arith.constant 0 : i32
    %c0_i32_0 = arith.constant 0 : i32
    return %arg0, %c0_i32 : i32, i32
  }
  func.func @transform_2(%arg0: i32) -> (i32, i32) {
    %c0_i32 = arith.constant 0 : i32
    %c0_i32_0 = arith.constant 0 : i32
    return %arg0, %c0_i32 : i32, i32
  }
}

</mosaic_0001>

<llo_original>
// kernel: cross_attention_block.3
$region0: #{cross_attention_block.3}
  #allocation0 [shape = 'u32[]', space=smem, size = 0x4, offset = 0x4, fixed_abs, tag = 'smem constant byte address 0x4 - core index']
  #allocation1 [shape = 'u32[144,128]{1,0:T(1,128)}', space=vmem, size = 0x12000, scoped, tag = 'internal scratch']
  %s0 = inlined_call_operand.vmem [shape: f32[64,256], index: 0, kind: input, shape index: {}]
  %s1 = inlined_call_operand.vmem [shape: f32[64,1], index: 1, kind: input, shape index: {}]
  %s2 = inlined_call_operand.vmem [shape: f32[64,256], index: 2, kind: output, shape index: {}]
  %s3 = sld [smem:[#allocation0]]
  $region41: #{cross_attention_block.3} parent=0
    _
  %s5 = ssub.s32 1, %s3
  %s6 = scalar_select 0, %s5, %s3
  loop: start=0, step=1, limit=4
  $region2: #{cross_attention_block.3} parent=0 // loop_pre_header
    _
  $region3: #{cross_attention_block.3} parent=0 // loop_header
    %s8 = sphi 0, %s12
    %p9 = scmp.ge.s32.totalorder %s8, 4
    %s18 = sphi 0, %s20
    %s21 = sphi 0, %s18
    %s22 = sphi 0, %s21
    %s38 = sphi 0, %s22
    %s44 = sphi 0, %s46
    %s47 = sphi 0, %s44
    %s48 = sphi 0, %s47
    %s64 = sphi 0, %s48
    %s70 = sphi 0, %s72
    %s73 = sphi 0, %s70
    %s74 = sphi 0, %s73
    %s90 = sphi 0, %s74
  $region4: #{cross_attention_block.3} parent=0 // loop_header_branch
    %11 = sbr.rel (%p9) target = $region8
  $region5: #{cross_attention_block.3} parent=0 // loop_body
    %s13 = ssub.s32 %s8, 1
    %s14 = ssub.s32 %s8, 2
    %s15 = sadd.s32 %s8, 1
    %s16 = ssub.s32 %s8, %s15
    %p17 = scmp.eq.s32.totalorder %s16, 0
    %s19 = sadd.s32 %s18, 1
    %s20 = scalar_select %p17, %s18, %s19
    %p23 = pneg %p17
    %p24 = scmp.eq.s32.totalorder %s8, 1
    %p25 = por %p23, %p24
    %p26 = scmp.ne.s32.totalorder %s18, %s21
    %p27 = scmp.eq.s32.totalorder %s8, 0
    %p28 = por %p26, %p27
    %p29 = scmp.ne.s32.totalorder %s18, %s21
    %p30 = scmp.eq.s32.totalorder %s13, 1
    %p31 = por %p29, %p30
    %p32 = scmp.ne.s32.totalorder %s21, %s22
    %p33 = scmp.eq.s32.totalorder %s13, 0
    %p34 = por %p32, %p33
    %p35 = scmp.ne.s32.totalorder %s21, %s22
    %p36 = scmp.eq.s32.totalorder %s14, 1
    %p37 = por %p35, %p36
    %p39 = scmp.ne.s32.totalorder %s22, %s38
    %p40 = scmp.eq.s32.totalorder %s14, 0
    %p41 = por %p39, %p40
    %s42 = ssub.s32 %s8, %s15
    %p43 = scmp.eq.s32.totalorder %s42, 0
    %s45 = sadd.s32 %s44, 1
    %s46 = scalar_select %p43, %s44, %s45
    %p49 = pneg %p43
    %p50 = scmp.eq.s32.totalorder %s8, 1
    %p51 = por %p49, %p50
    %p52 = scmp.ne.s32.totalorder %s44, %s47
    %p53 = scmp.eq.s32.totalorder %s8, 0
    %p54 = por %p52, %p53
    %p55 = scmp.ne.s32.totalorder %s44, %s47
    %p56 = scmp.eq.s32.totalorder %s13, 1
    %p57 = por %p55, %p56
    %p58 = scmp.ne.s32.totalorder %s47, %s48
    %p59 = scmp.eq.s32.totalorder %s13, 0
    %p60 = por %p58, %p59
    %p61 = scmp.ne.s32.totalorder %s47, %s48
    %p62 = scmp.eq.s32.totalorder %s14, 1
    %p63 = por %p61, %p62
    %p65 = scmp.ne.s32.totalorder %s48, %s64
    %p66 = scmp.eq.s32.totalorder %s14, 0
    %p67 = por %p65, %p66
    %s68 = ssub.s32 %s8, %s15
    %p69 = scmp.eq.s32.totalorder %s68, 0
    %s71 = sadd.s32 %s70, 1
    %s72 = scalar_select %p69, %s70, %s71
    %p75 = pneg %p69
    %p76 = scmp.eq.s32.totalorder %s8, 1
    %p77 = por %p75, %p76
    %p78 = scmp.ne.s32.totalorder %s70, %s73
    %p79 = scmp.eq.s32.totalorder %s8, 0
    %p80 = por %p78, %p79
    %p81 = scmp.ne.s32.totalorder %s70, %s73
    %p82 = scmp.eq.s32.totalorder %s13, 1
    %p83 = por %p81, %p82
    %p84 = scmp.ne.s32.totalorder %s73, %s74
    %p85 = scmp.eq.s32.totalorder %s13, 0
    %p86 = por %p84, %p85
    %p87 = scmp.ne.s32.totalorder %s73, %s74
    %p88 = scmp.eq.s32.totalorder %s14, 1
    %p89 = por %p87, %p88
    %p91 = scmp.ne.s32.totalorder %s74, %s90
    %p92 = scmp.eq.s32.totalorder %s14, 0
    %p93 = por %p91, %p92
    %p94 = scmp.le.s32.totalorder 1, %s8
    %p95 = scmp.lt.s32.totalorder %s8, 3
    %p96 = pnand %p94, %p95
    %p97 = pneg %p96
    // Predicated region
    $region9: #{cross_attention_block.3} parent=5 // pred_check
      _
    $region10: #{cross_attention_block.3} parent=5 // pred_check_branch
      %99 = sbr.rel (%p96) target = $region12
    $region11: #{cross_attention_block.3} parent=5 // pred_region
      %s100 = ssub.s32 %s8, 1
    $region12: #{cross_attention_block.3} parent=5 // pred_fallthru
      _
    %p101 = scmp.lt.s32.totalorder %s8, 2
    // Predicated region
    $region13: #{cross_attention_block.3} parent=5 // pred_check
      %p102 = pneg %p101
    $region14: #{cross_attention_block.3} parent=5 // pred_check_branch
      %104 = sbr.rel (%p102) target = $region16
    $region15: #{cross_attention_block.3} parent=5 // pred_region
      // Predicated region
      $region17: #{cross_attention_block.3} parent=15 // pred_check
        %p105 = pneg %p28
      $region18: #{cross_attention_block.3} parent=15 // pred_check_branch
        %107 = sbr.rel (%p105) target = $region20
      $region19: #{cross_attention_block.3} parent=15 // pred_region
        %s108 = smul.u32 4, %s8
        %p109 = scmp.lt.s32.totalorder %s108, 7
        %s110 = scalar_select %p109, %s108, 7
        %s111 = smul.addr %s110, 2
        %s112 = smul.addr %s111, 8
        %s113 = scalar_lea.vmem %s0, %s112
        %s114 = smul.u32 4, %s8
      $region20: #{cross_attention_block.3} parent=15 // pred_fallthru
        _
      // Predicated region
      $region21: #{cross_attention_block.3} parent=15 // pred_check
        %p115 = pneg %p54
      $region22: #{cross_attention_block.3} parent=15 // pred_check_branch
        %117 = sbr.rel (%p115) target = $region24
      $region23: #{cross_attention_block.3} parent=15 // pred_region
        %s118 = smul.u32 4, %s8
        %p119 = scmp.lt.s32.totalorder %s118, 7
        %s120 = scalar_select %p119, %s118, 7
        %s121 = smul.addr %s120, 8
        %s122 = scalar_lea.vmem %s1, %s121
        %s123 = smul.u32 4, %s8
      $region24: #{cross_attention_block.3} parent=15 // pred_fallthru
        _
    $region16: #{cross_attention_block.3} parent=5 // pred_fallthru
      _
    %p124 = scmp.le.s32.totalorder 1, %s8
    %p125 = scmp.lt.s32.totalorder %s8, 3
    %p126 = pnand %p124, %p125
    %p127 = pneg %p126
    // Predicated region
    $region25: #{cross_attention_block.3} parent=5 // pred_check
      _
    $region26: #{cross_attention_block.3} parent=5 // pred_check_branch
      %129 = sbr.rel (%p126) target = $region28
    $region27: #{cross_attention_block.3} parent=5 // pred_region
      %s130 = ssub.s32 %s8, 1
      %s131 = smul.u32 4, %s13
      %p132 = scmp.lt.s32.totalorder %s131, 7
      %s133 = scalar_select %p132, %s131, 7
      %s134 = smul.addr %s133, 2
      %s135 = smul.addr %s134, 8
      %s136 = scalar_lea.vmem %s0, %s135
      %p137 = pneg %p34
      %p138 = pneg %p31
      %s139 = smul.u32 4, %s13
      %p140 = scmp.lt.s32.totalorder %s139, 7
      %s141 = scalar_select %p140, %s139, 7
      %s142 = smul.addr %s141, 8
      %s143 = scalar_lea.vmem %s1, %s142
      %p144 = pneg %p60
      %p145 = pneg %p57
      %p146 = pneg %p86
      %p147 = pneg %p83
      %s148 = smul.u32 4, %s13
      %p149 = scmp.lt.s32.totalorder %s148, 7
      %s150 = scalar_select %p149, %s148, 7
      %s151 = smul.addr %s150, 2
      %s152 = smul.addr %s151, 8
      %s153 = scalar_lea.vmem %s2, %s152
      %s154 = smul.u32 4, %s13
      %p155 = scmp.lt.s32.totalorder %s154, 7
      %s156 = scalar_select %p155, %s154, 7
      %s157 = smul.addr %s156, 2
      %s158 = smul.addr %s157, 8
      %s159 = scalar_lea.vmem %s0, %s158
      %s160 = smul.u32 4, %s13
      %s161 = smul.u32 4, %s13
      %p162 = scmp.lt.s32.totalorder %s161, 7
      %s163 = scalar_select %p162, %s161, 7
      %s164 = smul.addr %s163, 8
      %s165 = scalar_lea.vmem %s1, %s164
      %s166 = smul.u32 4, %s13
      %s167 = smul.u32 4, %s13
      %p168 = scmp.lt.s32.totalorder %s167, 7
      %s169 = scalar_select %p168, %s167, 7
      %s170 = smul.addr %s169, 2
      %s171 = smul.addr %s170, 8
      %s172 = scalar_lea.vmem %s2, %s171
      %s173 = smul.u32 4, %s13
      %v174 = vld [vmem:[%s159] sm:$0xff]
      %v175 = vld [vmem:[%s159 + $0x8] sm:$0xff]
      %v176 = vld [vmem:[%s159 + $0x10] sm:$0xff]
      %v177 = vld [vmem:[%s159 + $0x18] sm:$0xff]
      %v178 = vld [vmem:[%s159 + $0x20] sm:$0xff]
      %v179 = vld [vmem:[%s159 + $0x28] sm:$0xff]
      %v180 = vld [vmem:[%s159 + $0x30] sm:$0xff]
      %v181 = vld [vmem:[%s159 + $0x38] sm:$0xff]
      %v182 = vld [vmem:[%s165] sm:$0xff]
      %v183 = vld [vmem:[%s165 + $0x8] sm:$0xff]
      %v184 = vld [vmem:[%s165 + $0x10] sm:$0xff]
      %v185 = vld [vmem:[%s165 + $0x18] sm:$0xff]
      %187 = vset.pattern.permute.xlu0 0
      %188 = vperm.xlu0 %187, %v182
      %v189 = vpop.permute.xlu0 %188
      %192 = vset.pattern.permute.xlu0 0
      %193 = vperm.xlu0 %192, %v183
      %v194 = vpop.permute.xlu0 %193
      %197 = vset.pattern.permute.xlu0 0
      %198 = vperm.xlu0 %197, %v184
      %v199 = vpop.permute.xlu0 %198
      %202 = vset.pattern.permute.xlu0 0
      %203 = vperm.xlu0 %202, %v185
      %v204 = vpop.permute.xlu0 %203
      %v206 = vadd.f32 %v174, %v189
      %v207 = vadd.f32 %v175, %v189
      %v208 = vadd.f32 %v176, %v194
      %v209 = vadd.f32 %v177, %v194
      %v210 = vadd.f32 %v178, %v199
      %v211 = vadd.f32 %v179, %v199
      %v212 = vadd.f32 %v180, %v204
      %v213 = vadd.f32 %v181, %v204
      %214 = vst [vmem:[%s172] sm:$0xff] %v206
      %215 = vst [vmem:[%s172 + $0x8] sm:$0xff] %v207
      %216 = vst [vmem:[%s172 + $0x10] sm:$0xff] %v208
      %217 = vst [vmem:[%s172 + $0x18] sm:$0xff] %v209
      %218 = vst [vmem:[%s172 + $0x20] sm:$0xff] %v210
      %219 = vst [vmem:[%s172 + $0x28] sm:$0xff] %v211
      %220 = vst [vmem:[%s172 + $0x30] sm:$0xff] %v212
      %221 = vst [vmem:[%s172 + $0x38] sm:$0xff] %v213
      %s222 = smul.u32 4, %s13
      %p223 = scmp.lt.s32.totalorder %s222, 7
      %s224 = scalar_select %p223, %s222, 7
      %s225 = smul.addr %s224, 2
      %s226 = smul.addr %s225, 8
      %s227 = scalar_lea.vmem %s2, %s226
      // Predicated region
      $region29: #{cross_attention_block.3} parent=27 // pred_check
        %p228 = pneg %p83
      $region30: #{cross_attention_block.3} parent=27 // pred_check_branch
        %230 = sbr.rel (%p228) target = $region32
      $region31: #{cross_attention_block.3} parent=27 // pred_region
        %s231 = smul.u32 4, %s13
      $region32: #{cross_attention_block.3} parent=27 // pred_fallthru
        _
    $region28: #{cross_attention_block.3} parent=5 // pred_fallthru
      _
    %p232 = scmp.le.s32.totalorder 2, %s8
    // Predicated region
    $region33: #{cross_attention_block.3} parent=5 // pred_check
      %p233 = pneg %p232
    $region34: #{cross_attention_block.3} parent=5 // pred_check_branch
      %235 = sbr.rel (%p233) target = $region36
    $region35: #{cross_attention_block.3} parent=5 // pred_region
      %s236 = ssub.s32 %s8, 2
      // Predicated region
      $region37: #{cross_attention_block.3} parent=35 // pred_check
        %p237 = pneg %p89
      $region38: #{cross_attention_block.3} parent=35 // pred_check_branch
        %239 = sbr.rel (%p237) target = $region40
      $region39: #{cross_attention_block.3} parent=35 // pred_region
        %s240 = smul.u32 4, %s14
        %p241 = scmp.lt.s32.totalorder %s240, 7
        %s242 = scalar_select %p241, %s240, 7
        %s243 = smul.addr %s242, 2
        %s244 = smul.addr %s243, 8
        %s245 = scalar_lea.vmem %s2, %s244
      $region40: #{cross_attention_block.3} parent=35 // pred_fallthru
        _
    $region36: #{cross_attention_block.3} parent=5 // pred_fallthru
      _
  $region6: #{cross_attention_block.3} parent=0 // loop_footer
    %s12 = sadd.s32 1, %s8
  $region7: #{cross_attention_block.3} parent=0 // loop_footer_branch
    %7 = sbr.rel target = $region3
  $region8: #{cross_attention_block.3} parent=0 // loop_exit
    _

// kernel: cross_attention_block.2
$region0: #{cross_attention_block.2}
  #allocation0 [shape = 'u32[]', space=smem, size = 0x4, offset = 0x4, fixed_abs, tag = 'smem constant byte address 0x4 - core index']
  #allocation1 [shape = 'u32[144,128]{1,0:T(1,128)}', space=vmem, size = 0x12000, scoped, tag = 'internal scratch']
  %s0 = inlined_call_operand.vmem [shape: f32[2,8], index: 0, kind: input, shape index: {}]
  %s1 = inlined_call_operand.vmem [shape: f32[2,8], index: 1, kind: input, shape index: {}]
  %s2 = inlined_call_operand.vmem [shape: f32[8,32], index: 2, kind: input, shape index: {}]
  %s3 = inlined_call_operand.vmem [shape: f32[1,32], index: 3, kind: input, shape index: {}]
  %s4 = inlined_call_operand.hbm [shape: f32[32,32], index: 4, kind: input, shape index: {}]
  %s5 = inlined_call_operand.vmem [shape: f32[1,32], index: 5, kind: input, shape index: {}]
  %s6 = inlined_call_operand.vmem [shape: f32[2,32], index: 6, kind: output, shape index: {}]
  %s7 = sld [smem:[#allocation0]]
  $region38: #{cross_attention_block.2} parent=0
    _
  %s9 = ssub.s32 1, %s7
  %s10 = scalar_select 0, %s9, %s7
  $region1: #{cross_attention_block.2} parent=0
    #allocation2 [shape = 'u8[16384]{0}', space=vmem, size = 0x4000, scoped, tag = 'input window, operand 4, single buffered']
    #allocation3 [shape = 's32[1]{0}', space=sflag, size = 0x4, scoped, tag = 'scoped memory for cross_attention_block.2']
    %11 = vsyncpa [#allocation3], 0
    // Predicated region
    $region2: #{cross_attention_block.2} parent=1 // pred_check
      _
    $region3: #{cross_attention_block.2} parent=1 // pred_check_branch
      %13 = sbr.rel (0) target = $region5
    $region4: #{cross_attention_block.2} parent=1 // pred_region
      _
    $region5: #{cross_attention_block.2} parent=1 // pred_fallthru
      _
    // Predicated region
    $region6: #{cross_attention_block.2} parent=1 // pred_check
      _
    $region7: #{cross_attention_block.2} parent=1 // pred_check_branch
      %15 = sbr.rel (0) target = $region9
    $region8: #{cross_attention_block.2} parent=1 // pred_region
      _
    $region9: #{cross_attention_block.2} parent=1 // pred_fallthru
      _
    // Predicated region
    $region10: #{cross_attention_block.2} parent=1 // pred_check
      _
    $region11: #{cross_attention_block.2} parent=1 // pred_check_branch
      %17 = sbr.rel (0) target = $region13
    $region12: #{cross_attention_block.2} parent=1 // pred_region
      _
    $region13: #{cross_attention_block.2} parent=1 // pred_fallthru
      _
    // Predicated region
    $region14: #{cross_attention_block.2} parent=1 // pred_check
      _
    $region15: #{cross_attention_block.2} parent=1 // pred_check_branch
      %19 = sbr.rel (0) target = $region17
    $region16: #{cross_attention_block.2} parent=1 // pred_region
      _
    $region17: #{cross_attention_block.2} parent=1 // pred_fallthru
      _
    // Predicated region
    $region18: #{cross_attention_block.2} parent=1 // pred_check
      _
    $region19: #{cross_attention_block.2} parent=1 // pred_check_branch
      %21 = sbr.rel (0) target = $region21
    $region20: #{cross_attention_block.2} parent=1 // pred_region
      %s23 = ssub.s32 512, 512
      %24 = vsyncadd [#allocation3], %s23
      %s25 = sshll.u32 [#allocation2], 4
      %s26 = int_to_ptr.vmem [resolvable:$true] %s25
      %31 = dma.hbm_to_vmem [thread:$0]  %s4, 512, %s26, [#allocation3], 128, 128, 8
    $region21: #{cross_attention_block.2} parent=1 // pred_fallthru
      _
    // Predicated region
    $region22: #{cross_attention_block.2} parent=1 // pred_check
      _
    $region23: #{cross_attention_block.2} parent=1 // pred_check_branch
      %33 = sbr.rel (0) target = $region25
    $region24: #{cross_attention_block.2} parent=1 // pred_region
      _
    $region25: #{cross_attention_block.2} parent=1 // pred_fallthru
      _
    // Predicated region
    $region26: #{cross_attention_block.2} parent=1 // pred_check
      _
    $region27: #{cross_attention_block.2} parent=1 // pred_check_branch
      %35 = sbr.rel (0) target = $region29
    $region28: #{cross_attention_block.2} parent=1 // pred_region
      %36 = dma.done [#allocation3], 512
    $region29: #{cross_attention_block.2} parent=1 // pred_fallthru
      _
    %v37 = vld [vmem:[%s0] sm:$0x3]
    %v38 = vld [vmem:[%s1] sm:$0x3]
    %vm39 = vcmask 58368
    %v40 = vsel %vm39, %v37, 0.0
    %41 = vadd.xlane.f32.xlu0 %v40
    %v42 = vpop.xlane.xlu0 %41
    %v43 = vrcp.pop 8.0
    %v44 = vmul.f32 %v42, %v43
    %v45 = vsub.f32 %v37, %v44
    %v46 = vmul.f32 %v45, %v45
    %v47 = vsel %vm39, %v46, 0.0
    %48 = vadd.xlane.f32.xlu0 %v47
    %v49 = vpop.xlane.xlu0 %48
    %v50 = vmul.f32 %v49, %v43
    %v51 = vadd.f32 %v50, 1e-05
    %v52 = vrsqrt.pop %v51
    %v53 = vmul.f32 %v45, %v52
    %v54 = vlaneseq
    %v55 = vshrl.u32 %v54, 7
    %v56 = vsub.s32 0, %v55
    %v57 = vrot.slane %v38, %v56
    %v58 = vmul.f32 %v53, %v57
    %v59 = vlaneseq
    %v60 = vshrl.u32 %v59, 7
    %v61 = vsub.s32 1, %v60
    %v62 = vrot.slane %v38, %v61
    %v63 = vadd.f32 %v58, %v62
    %v64 = vld [vmem:[%s2] sm:$0xff]
    %v65 = vld [vmem:[%s3] sm:$0x1]
    %v67 = vlaneseq
    %v68 = vshrl.u32 %v67, 7
    %v69 = vsub.s32 0, %v68
    %v70 = vrot.slane %v65, %v69
    %vm72 = vcmask 64512
    %v74 = vsel %vm72, %v63, 0
    %76 = vmatprep.subr.mxu0 0.0
    %77 = vmatpush1.msra.mxu0 0.0
    %78 = vmatprep.subr.mxu0 0.0
    %79 = vmatpush1.msra.mxu0 0.0
    %80 = vmatprep.subr.mxu0 0.0
    %81 = vmatpush1.msra.mxu0 0.0
    %82 = vmatprep.subr.mxu0 0.0
    %83 = vmatpush1.msra.mxu0 0.0
    %84 = vmatprep.subr.mxu0 0.0
    %85 = vmatpush1.msra.mxu0 0.0
    %86 = vmatprep.subr.mxu0 0.0
    %87 = vmatpush1.msra.mxu0 0.0
    %88 = vmatprep.subr.mxu0 0.0
    %89 = vmatpush1.msra.mxu0 0.0
    %90 = vmatprep.subr.mxu0 0.0
    %91 = vmatpush1.msra.mxu0 0.0
    %92 = vmatprep.subr.mxu0 0.0
    %93 = vmatpush1.msra.mxu0 0.0
    %94 = vmatprep.subr.mxu0 0.0
    %95 = vmatpush1.msra.mxu0 0.0
    %96 = vmatprep.subr.mxu0 0.0
    %97 = vmatpush1.msra.mxu0 0.0
    %98 = vmatprep.subr.mxu0 0.0
    %99 = vmatpush1.msra.mxu0 0.0
    %100 = vmatprep.subr.mxu0 0.0
    %101 = vmatpush1.msra.mxu0 0.0
    %102 = vmatprep.subr.mxu0 0.0
    %103 = vmatpush1.msra.mxu0 0.0
    %104 = vmatprep.subr.mxu0 0.0
    %105 = vmatpush1.msra.mxu0 0.0
    %106 = vmatprep.subr.mxu0 0.0
    %107 = vmatpush1.msra.mxu0 %v64
    %108 = vmatprep.subr.mxu0 0.0
    %109 = vmatpush2.msra.mxu0 0.0
    %110 = vmatprep.subr.mxu0 0.0
    %111 = vmatpush2.msra.mxu0 0.0
    %112 = vmatprep.subr.mxu0 0.0
    %113 = vmatpush2.msra.mxu0 0.0
    %114 = vmatprep.subr.mxu0 0.0
    %115 = vmatpush2.msra.mxu0 0.0
    %116 = vmatprep.subr.mxu0 0.0
    %117 = vmatpush2.msra.mxu0 0.0
    %118 = vmatprep.subr.mxu0 0.0
    %119 = vmatpush2.msra.mxu0 0.0
    %120 = vmatprep.subr.mxu0 0.0
    %121 = vmatpush2.msra.mxu0 0.0
    %122 = vmatprep.subr.mxu0 0.0
    %123 = vmatpush2.msra.mxu0 0.0
    %124 = vmatprep.subr.mxu0 0.0
    %125 = vmatpush2.msra.mxu0 0.0
    %126 = vmatprep.subr.mxu0 0.0
    %127 = vmatpush2.msra.mxu0 0.0
    %128 = vmatprep.subr.mxu0 0.0
    %129 = vmatpush2.msra.mxu0 0.0
    %130 = vmatprep.subr.mxu0 0.0
    %131 = vmatpush2.msra.mxu0 0.0
    %132 = vmatprep.subr.mxu0 0.0
    %133 = vmatpush2.msra.mxu0 0.0
    %134 = vmatprep.subr.mxu0 0.0
    %135 = vmatpush2.msra.mxu0 0.0
    %136 = vmatprep.subr.mxu0 0.0
    %137 = vmatpush2.msra.mxu0 0.0
    %138 = vmatprep.subr.mxu0 0.0
    %139 = vmatpush2.msra.mxu0 0.0
    %140 = vmatprep.mubr.f32.mxu0 0.0
    %141 = vmatmul.mubr.f32.gmra.mxu0 %v74
    %v142 = vpop.f32.mrf.mxu0
    %v143 = vadd.f32 %v70, %v142
    %v144 = vpop.f32.mrf.mxu0
    %145 = vdwg.mxu0
    %v146 = vld [vmem:[#allocation2] sm:$0xff]
    %v147 = vld [vmem:[#allocation2 + $0x8] sm:$0xff]
    %v148 = vld [vmem:[#allocation2 + $0x10] sm:$0xff]
    %v149 = vld [vmem:[#allocation2 + $0x18] sm:$0xff]
    %v150 = vld [vmem:[%s5] sm:$0x1]
    %v152 = vlaneseq
    %v153 = vshrl.u32 %v152, 7
    %v154 = vsub.s32 0, %v153
    %v155 = vrot.slane %v150, %v154
    %vm157 = vcmask 261120
    %v159 = vsel %vm157, %v143, 0
    %161 = vmatprep.subr.mxu0 0.0
    %162 = vmatpush1.msra.mxu0 0.0
    %163 = vmatprep.subr.mxu0 0.0
    %164 = vmatpush1.msra.mxu0 0.0
    %165 = vmatprep.subr.mxu0 0.0
    %166 = vmatpush1.msra.mxu0 0.0
    %167 = vmatprep.subr.mxu0 0.0
    %168 = vmatpush1.msra.mxu0 0.0
    %169 = vmatprep.subr.mxu0 0.0
    %170 = vmatpush1.msra.mxu0 0.0
    %171 = vmatprep.subr.mxu0 0.0
    %172 = vmatpush1.msra.mxu0 0.0
    %173 = vmatprep.subr.mxu0 0.0
    %174 = vmatpush1.msra.mxu0 0.0
    %175 = vmatprep.subr.mxu0 0.0
    %176 = vmatpush1.msra.mxu0 0.0
    %177 = vmatprep.subr.mxu0 0.0
    %178 = vmatpush1.msra.mxu0 0.0
    %179 = vmatprep.subr.mxu0 0.0
    %180 = vmatpush1.msra.mxu0 0.0
    %181 = vmatprep.subr.mxu0 0.0
    %182 = vmatpush1.msra.mxu0 0.0
    %183 = vmatprep.subr.mxu0 0.0
    %184 = vmatpush1.msra.mxu0 0.0
    %185 = vmatprep.subr.mxu0 0.0
    %186 = vmatpush1.msra.mxu0 %v149
    %187 = vmatprep.subr.mxu0 0.0
    %188 = vmatpush1.msra.mxu0 %v148
    %189 = vmatprep.subr.mxu0 0.0
    %190 = vmatpush1.msra.mxu0 %v147
    %191 = vmatprep.subr.mxu0 0.0
    %192 = vmatpush1.msra.mxu0 %v146
    %193 = vmatprep.subr.mxu0 0.0
    %194 = vmatpush2.msra.mxu0 0.0
    %195 = vmatprep.subr.mxu0 0.0
    %196 = vmatpush2.msra.mxu0 0.0
    %197 = vmatprep.subr.mxu0 0.0
    %198 = vmatpush2.msra.mxu0 0.0
    %199 = vmatprep.subr.mxu0 0.0
    %200 = vmatpush2.msra.mxu0 0.0
    %201 = vmatprep.subr.mxu0 0.0
    %202 = vmatpush2.msra.mxu0 0.0
    %203 = vmatprep.subr.mxu0 0.0
    %204 = vmatpush2.msra.mxu0 0.0
    %205 = vmatprep.subr.mxu0 0.0
    %206 = vmatpush2.msra.mxu0 0.0
    %207 = vmatprep.subr.mxu0 0.0
    %208 = vmatpush2.msra.mxu0 0.0
    %209 = vmatprep.subr.mxu0 0.0
    %210 = vmatpush2.msra.mxu0 0.0
    %211 = vmatprep.subr.mxu0 0.0
    %212 = vmatpush2.msra.mxu0 0.0
    %213 = vmatprep.subr.mxu0 0.0
    %214 = vmatpush2.msra.mxu0 0.0
    %215 = vmatprep.subr.mxu0 0.0
    %216 = vmatpush2.msra.mxu0 0.0
    %217 = vmatprep.subr.mxu0 0.0
    %218 = vmatpush2.msra.mxu0 0.0
    %219 = vmatprep.subr.mxu0 0.0
    %220 = vmatpush2.msra.mxu0 0.0
    %221 = vmatprep.subr.mxu0 0.0
    %222 = vmatpush2.msra.mxu0 0.0
    %223 = vmatprep.subr.mxu0 0.0
    %224 = vmatpush2.msra.mxu0 0.0
    %225 = vmatprep.mubr.f32.mxu0 0.0
    %226 = vmatmul.mubr.f32.gmra.mxu0 %v159
    %v227 = vpop.f32.mrf.mxu0
    %v228 = vadd.f32 %v155, %v227
    %v229 = vpop.f32.mrf.mxu0
    %230 = vdwg.mxu0
    %vm231 = vcmask 254976
    %232 = vst.msk [vmem:[%s6] sm:$0x3] %vm231, %v228
    // Predicated region
    $region30: #{cross_attention_block.2} parent=1 // pred_check
      _
    $region31: #{cross_attention_block.2} parent=1 // pred_check_branch
      %234 = sbr.rel (0) target = $region33
    $region32: #{cross_attention_block.2} parent=1 // pred_region
      _
    $region33: #{cross_attention_block.2} parent=1 // pred_fallthru
      _
    // Predicated region
    $region34: #{cross_attention_block.2} parent=1 // pred_check
      _
    $region35: #{cross_attention_block.2} parent=1 // pred_check_branch
      %236 = sbr.rel (0) target = $region37
    $region36: #{cross_attention_block.2} parent=1 // pred_region
      _
    $region37: #{cross_attention_block.2} parent=1 // pred_fallthru
      _
    %237 = vsyncpa [#allocation3], 1

</llo_original>
